<compile_context>
chip_gen: v7x
topology: tpu7x:2x2x1
jax: 0.10.0
libtpu: 0.0.40
codegen_flags: <defaults>
</compile_context>

<pallas_src>
import jax
import jax.numpy as jnp
from jax import lax
from jax.experimental import pallas as pl
from jax.experimental.pallas import tpu as pltpu


def pool_linear_kernel(x_ref, wt_ref, b_ref, o_ref):
    """Fused spatial average-pool + linear projection for one batch block.

    x_ref  : (Bblk, C, T, HW)  feature block (HW on the 128-lane axis)
    wt_ref : (C, O)            transposed linear weight
    b_ref  : (1, O)            linear bias
    o_ref  : (Bblk, T, O)      output block
    """
    bblk = x_ref.shape[0]
    hw = x_ref.shape[-1]
    inv_hw = jnp.float32(1.0 / hw)

    # Block-wide pool; accumulate in f32 (no-op cast when x is already f32).
    # TODO(synk): for very large / non-128-multiple HW, a two-stage
    # (HW//128, 128) reduce would keep most of the work off the XLU.
    x = x_ref[...].astype(jnp.float32)           # (Bblk, C, T, HW)
    pooled = jnp.sum(x, axis=-1) * inv_hw        # (Bblk, C, T) one lane reduce

    # Build the (C, Bblk*T) LHS by laying per-batch (C, T) slabs side by side
    # along the lane axis — no in-kernel transposes needed.
    if bblk > 1:
        lhs_t = jnp.concatenate([pooled[b] for b in range(bblk)], axis=1)
    else:
        lhs_t = pooled[0]                        # (C, T)

    wt = wt_ref[...].astype(jnp.float32)         # no-op when already f32
    # Single MXU matmul, transpose-on-A: contract C -> (Bblk*T, O).
    y = lax.dot_general(
        lhs_t, wt,
        dimension_numbers=(((0,), (0,)), ((), ())),
        preferred_element_type=jnp.float32)
    y = y + b_ref[...].astype(jnp.float32)       # one bias broadcast
    o_ref[...] = y.reshape(o_ref.shape).astype(o_ref.dtype)  # one full-block store


def _vmem_block_budget_and_cores():
    """Generation-aware VMEM budget for the x block and TensorCores/chip."""
    kind = ""
    try:
        kind = jax.devices()[0].device_kind.lower()
    except Exception:
        pass
    if "v7" in kind:
        return 14 << 20, 2     # 64 MiB physical / 32 MiB default scoped, 2 TCs
    if "v6" in kind:
        return 24 << 20, 1     # 128 MiB physical, raise scoped limit explicitly
    return 6 << 20, 1          # v5e / unknown: stay under 16 MiB default scoped


def visece_video_head(x, weight, bias):
    """x: (B, C, T, H, W) f32/bf16 (ResNet3dSlowOnly output)
       weight: (O, C), bias: (O,)  — nn.Linear(res_out_channels, output_channels)
       returns: (B, T, O) in x.dtype"""
    B, C, T, H, W = x.shape
    O = weight.shape[0]
    HW = H * W

    # Contiguous reshape only — no HBM relayout of the feature map.
    xr = x.reshape(B, C, T, HW)
    # In a real model these would be precomputed once at init; here they are
    # trivially small (constant-folded under jit).
    wt = weight.T                      # (C, O)
    b2 = bias.reshape(1, O)            # (1, O)

    x_item = jnp.dtype(x.dtype).itemsize
    out_item = x_item
    w_bytes = weight.size * jnp.dtype(weight.dtype).itemsize
    b_bytes = bias.size * jnp.dtype(bias.dtype).itemsize
    bytes_per_b = C * T * HW * x_item

    budget, n_cores = _vmem_block_budget_and_cores()

    # Batch-block sizing: biggest block that fits the (double-buffered) budget.
    bblk = max(1, int(budget // (2 * max(bytes_per_b, 1))))
    bblk = min(bblk, B)
    # Split across TensorCores only when each step carries enough bytes to be
    # worth the ~0.35 us per-step overhead.
    if n_cores > 1 and B >= n_cores:
        per_core = max(1, B // n_cores)
        if per_core * bytes_per_b >= (3 << 20) // 2:   # >= ~1.5 MiB per step
            bblk = min(bblk, per_core)
    # TODO(synk): for awkward B this can degrade toward bblk=1; tile T instead
    # if that ever matters.
    while B % bblk:
        bblk -= 1
    grid = (B // bblk,)

    # Explicit VMEM limit sized from actual double-buffered usage (+ slack).
    needed = (2 * bblk * bytes_per_b            # x block, double-buffered
              + 2 * bblk * T * O * out_item     # out block, double-buffered
              + 2 * (w_bytes + b_bytes)         # resident weight / bias blocks
              + (2 << 20))                      # compiler scratch slack
    vmem_limit = int(max(needed, 16 << 20))

    cost = pl.CostEstimate(
        flops=2 * B * T * C * O + B * C * T * HW,      # matmul + pooling adds
        transcendentals=0,
        bytes_accessed=(B * C * T * HW * x_item        # read x
                        + B * T * O * out_item         # write out
                        + w_bytes + b_bytes),
    )

    return pl.pallas_call(
        pool_linear_kernel,
        out_shape=jax.ShapeDtypeStruct((B, T, O), x.dtype),
        grid_spec=pltpu.PrefetchScalarGridSpec(
            num_scalar_prefetch=0,
            grid=grid,
            in_specs=[
                pl.BlockSpec((bblk, C, T, HW), lambda i: (i, 0, 0, 0)),
                pl.BlockSpec((C, O), lambda i: (0, 0)),
                pl.BlockSpec((1, O), lambda i: (0, 0)),
            ],
            out_specs=pl.BlockSpec((bblk, T, O), lambda i: (i, 0, 0)),
        ),
        compiler_params=pltpu.CompilerParams(
            dimension_semantics=("parallel",),
            vmem_limit_bytes=vmem_limit),
        cost_estimate=cost,
    )(xr, wt, b2)


def reference(x, weight, bias):
    """Pure-JAX reference mirroring the PyTorch forward."""
    pooled = jnp.mean(x.astype(jnp.float32), axis=(3, 4))   # (B, C, T)
    pooled = jnp.transpose(pooled, (0, 2, 1))               # (B, T, C)
    return (pooled @ weight.T.astype(jnp.float32)
            + bias.astype(jnp.float32)).astype(x.dtype)     # (B, T, O)


if __name__ == "__main__":
    # Small, deterministic shapes consistent with the module:
    #   res_out_channels = 32, output_channels = 64, B=2, T=8, H=W=16.
    B, C, T, H, W = 2, 32, 8, 16, 16
    O = 64

    key = jax.random.PRNGKey(0)
    kx, kw, kb = jax.random.split(key, 3)
    # x stands in for the ResNet3dSlowOnly feature map (see TODO above).
    x = jax.random.normal(kx, (B, C, T, H, W), dtype=jnp.float32)
    weight = jax.random.normal(kw, (O, C), dtype=jnp.float32) * 0.05
    bias = jax.random.normal(kb, (O,), dtype=jnp.float32) * 0.01

    out = visece_video_head(x, weight, bias)
    out = jax.block_until_ready(out)

    ref = reference(x, weight, bias)
    assert out.shape == (B, T, O), out.shape
    assert jnp.allclose(out, ref, atol=1e-4, rtol=1e-4), "mismatch vs reference"

    print("KERNEL_OK")
</pallas_src>

<mosaic_0001>
module attributes {stable_mosaic.version = 11 : i64} {
  func.func @pool_linear_kernel(%arg0: i32, %arg1: memref<2x32x8x256xf32, #tpu.memory_space<vmem>>, %arg2: memref<32x64xf32, #tpu.memory_space<vmem>>, %arg3: memref<1x64xf32, #tpu.memory_space<vmem>>, %arg4: memref<2x8x64xf32, #tpu.memory_space<vmem>>) attributes {dimension_semantics = [#tpu.dimension_semantics<parallel>], iteration_bounds = array<i64: 1>, scalar_prefetch = 0 : i64, scratch_operands = 0 : i64, tpu.core_type = #tpu.core_type<tc>, window_params = [{transform_indices = @transform_0, window_bounds = array<i64: 2, 32, 8, 256>}, {pipeline_mode = #tpu.pipeline_mode<synchronous>, transform_indices = @transform_1, window_bounds = array<i64: 32, 64>}, {pipeline_mode = #tpu.pipeline_mode<synchronous>, transform_indices = @transform_2, window_bounds = array<i64: 1, 64>}, {transform_indices = @transform_3, window_bounds = array<i64: 2, 8, 64>}]} {
    %c0 = arith.constant 0 : index
    %c0_0 = arith.constant 0 : index
    %c0_1 = arith.constant 0 : index
    %c0_2 = arith.constant 0 : index
    %0 = vector.load %arg1[%c0, %c0_0, %c0_1, %c0_2] : memref<2x32x8x256xf32, #tpu.memory_space<vmem>>, vector<2x32x8x256xf32>
    %cst = arith.constant dense<0.000000e+00> : vector<2x32x8xf32>
    %1 = vector.multi_reduction <add>, %0, %cst [3] : vector<2x32x8x256xf32> to vector<2x32x8xf32>
    %cst_3 = arith.constant 3.906250e-03 : f32
    %2 = vector.broadcast %cst_3 : f32 to vector<2x32x8xf32>
    %3 = arith.mulf %1, %2 : vector<2x32x8xf32>
    %4 = vector.extract_strided_slice %3 {offsets = [0, 0, 0], sizes = [1, 32, 8], strides = [1, 1, 1]} : vector<2x32x8xf32> to vector<1x32x8xf32>
    %5 = vector.shape_cast %4 : vector<1x32x8xf32> to vector<32x8xf32>
    %6 = vector.extract_strided_slice %3 {offsets = [1, 0, 0], sizes = [1, 32, 8], strides = [1, 1, 1]} : vector<2x32x8xf32> to vector<1x32x8xf32>
    %7 = vector.shape_cast %6 : vector<1x32x8xf32> to vector<32x8xf32>
    %8 = tpu.concatenate %5, %7 in 1 : vector<32x8xf32>, vector<32x8xf32> -> vector<32x16xf32>
    %c0_4 = arith.constant 0 : index
    %c0_5 = arith.constant 0 : index
    %9 = vector.load %arg2[%c0_4, %c0_5] : memref<32x64xf32, #tpu.memory_space<vmem>>, vector<32x64xf32>
    %cst_6 = arith.constant dense<0.000000e+00> : vector<16x64xf32>
    %10 = tpu.matmul %8, %9, %cst_6 {dimension_numbers = #tpu.dot_dimension_numbers<[0], [0], [1], [1], [0, 1, 1, 1], [], []>} : vector<32x16xf32>, vector<32x64xf32>, vector<16x64xf32> -> vector<16x64xf32>
    %c0_7 = arith.constant 0 : index
    %c0_8 = arith.constant 0 : index
    %11 = vector.load %arg3[%c0_7, %c0_8] : memref<1x64xf32, #tpu.memory_space<vmem>>, vector<1x64xf32>
    %12 = vector.broadcast %11 : vector<1x64xf32> to vector<16x64xf32>
    %13 = arith.addf %10, %12 : vector<16x64xf32>
    %14 = vector.shape_cast %13 : vector<16x64xf32> to vector<2x8x64xf32>
    %c0_9 = arith.constant 0 : index
    %c0_10 = arith.constant 0 : index
    %c0_11 = arith.constant 0 : index
    %15 = vector.load %arg4[%c0_9, %c0_10, %c0_11] : memref<2x8x64xf32, #tpu.memory_space<vmem>>, vector<2x8x64xf32>
    tpu.vector_store %arg4[%c0_9, %c0_10, %c0_11], %14 {strides = array<i32>} : memref<2x8x64xf32, #tpu.memory_space<vmem>>, vector<2x8x64xf32>,
    return
  }
  func.func @transform_0(%arg0: i32) -> (i32, i32, i32, i32) {
    %c0_i32 = arith.constant 0 : i32
    %c0_i32_0 = arith.constant 0 : i32
    %c0_i32_1 = arith.constant 0 : i32
    %c0_i32_2 = arith.constant 0 : i32
    return %arg0, %c0_i32, %c0_i32_0, %c0_i32_1 : i32, i32, i32, i32
  }
  func.func @transform_1(%arg0: i32) -> (i32, i32) {
    %c0_i32 = arith.constant 0 : i32
    %c0_i32_0 = arith.constant 0 : i32
    %c0_i32_1 = arith.constant 0 : i32
    return %c0_i32, %c0_i32_0 : i32, i32
  }
  func.func @transform_2(%arg0: i32) -> (i32, i32) {
    %c0_i32 = arith.constant 0 : i32
    %c0_i32_0 = arith.constant 0 : i32
    %c0_i32_1 = arith.constant 0 : i32
    return %c0_i32, %c0_i32_0 : i32, i32
  }
  func.func @transform_3(%arg0: i32) -> (i32, i32, i32) {
    %c0_i32 = arith.constant 0 : i32
    %c0_i32_0 = arith.constant 0 : i32
    %c0_i32_1 = arith.constant 0 : i32
    return %arg0, %c0_i32, %c0_i32_0 : i32, i32, i32
  }
}

</mosaic_0001>

<llo_original>
// kernel: tpu_custom_call.1
$region0: #{tpu_custom_call.1}
  #allocation0 [shape = 'u32[]', space=smem, size = 0x4, offset = 0x4, fixed_abs, tag = 'smem constant byte address 0x4 - core index']
  #allocation1 [shape = 'u32[144,128]{1,0:T(1,128)}', space=vmem, size = 0x12000, scoped, tag = 'internal scratch']
  %s0 = inlined_call_operand.hbm [shape: f32[2,32,8,256], index: 0, kind: input, shape index: {}]
  %s1 = inlined_call_operand.hbm [shape: f32[32,64], index: 1, kind: input, shape index: {}]
  %s2 = inlined_call_operand.vmem [shape: f32[1,64], index: 2, kind: input, shape index: {}]
  %s3 = inlined_call_operand.hbm [shape: f32[2,8,64], index: 3, kind: output, shape index: {}]
  %s4 = sld [smem:[#allocation0]]
  $region30: #{tpu_custom_call.1} parent=0
    _
  %s6 = ssub.s32 1, %s4
  %s7 = scalar_select 0, %s6, %s4
  $region1: #{tpu_custom_call.1} parent=0
    #allocation2 [shape = 'u8[524288]{0}', space=vmem, size = 0x80000, scoped, tag = 'input window, operand 0, single buffered']
    #allocation3 [shape = 's32[1]{0}', space=sflag, size = 0x4, scoped, tag = 'scoped memory for tpu_custom_call.1']
    #allocation4 [shape = 's32[1]{0}', space=sflag, size = 0x4, scoped, tag = 'scoped memory for tpu_custom_call.1']
    #allocation5 [shape = 'u8[16384]{0}', space=vmem, size = 0x4000, scoped, tag = 'input window, operand 1, single buffered']
    #allocation6 [shape = 's32[1]{0}', space=sflag, size = 0x4, scoped, tag = 'scoped memory for tpu_custom_call.1']
    #allocation7 [shape = 'u8[8192]{0}', space=vmem, size = 0x2000, scoped, tag = 'output window, operand 0, single buffered']
    %8 = vsyncpa [#allocation3], 0
    %9 = vsyncpa [#allocation6], 0
    %10 = vsyncpa [#allocation4], 0
    // Predicated region
    $region2: #{tpu_custom_call.1} parent=1 // pred_check
      _
    $region3: #{tpu_custom_call.1} parent=1 // pred_check_branch
      %12 = sbr.rel (0) target = $region5
    $region4: #{tpu_custom_call.1} parent=1 // pred_region
      %s14 = ssub.s32 16384, 16384
      %15 = vsyncadd [#allocation3], %s14
      %s16 = sshll.u32 [#allocation2], 4
      %s17 = int_to_ptr.vmem [resolvable:$true] %s16
      %22 = dma.hbm_to_vmem [thread:$0]  %s0, 16384, %s17, [#allocation3], 256, 256, 16
    $region5: #{tpu_custom_call.1} parent=1 // pred_fallthru
      _
    // Predicated region
    $region6: #{tpu_custom_call.1} parent=1 // pred_check
      _
    $region7: #{tpu_custom_call.1} parent=1 // pred_check_branch
      %24 = sbr.rel (0) target = $region9
    $region8: #{tpu_custom_call.1} parent=1 // pred_region
      %s26 = ssub.s32 512, 512
      %27 = vsyncadd [#allocation6], %s26
      %s28 = sshll.u32 [#allocation5], 4
      %s29 = int_to_ptr.vmem [resolvable:$true] %s28
      %34 = dma.hbm_to_vmem [thread:$0]  %s1, 512, %s29, [#allocation6], 128, 128, 8
    $region9: #{tpu_custom_call.1} parent=1 // pred_fallthru
      _
    // Predicated region
    $region10: #{tpu_custom_call.1} parent=1 // pred_check
      _
    $region11: #{tpu_custom_call.1} parent=1 // pred_check_branch
      %36 = sbr.rel (0) target = $region13
    $region12: #{tpu_custom_call.1} parent=1 // pred_region
      _
    $region13: #{tpu_custom_call.1} parent=1 // pred_fallthru
      _
    // Predicated region
    $region14: #{tpu_custom_call.1} parent=1 // pred_check
      _
    $region15: #{tpu_custom_call.1} parent=1 // pred_check_branch
      %38 = sbr.rel (0) target = $region17
    $region16: #{tpu_custom_call.1} parent=1 // pred_region
      %39 = dma.done [#allocation3], 16384
    $region17: #{tpu_custom_call.1} parent=1 // pred_fallthru
      _
    // Predicated region
    $region18: #{tpu_custom_call.1} parent=1 // pred_check
      _
    $region19: #{tpu_custom_call.1} parent=1 // pred_check_branch
      %41 = sbr.rel (0) target = $region21
    $region20: #{tpu_custom_call.1} parent=1 // pred_region
      %42 = dma.done [#allocation6], 512
    $region21: #{tpu_custom_call.1} parent=1 // pred_fallthru
      _
    %v43 = vld [vmem:[#allocation2] sm:$0xff]
    %v44 = vld [vmem:[#allocation2 + $0x8] sm:$0xff]
    %v45 = vld [vmem:[#allocation2 + $0x10] sm:$0xff]
    %v46 = vld [vmem:[#allocation2 + $0x18] sm:$0xff]
    %v47 = vld [vmem:[#allocation2 + $0x20] sm:$0xff]
    %v48 = vld [vmem:[#allocation2 + $0x28] sm:$0xff]
    %v49 = vld [vmem:[#allocation2 + $0x30] sm:$0xff]
    %v50 = vld [vmem:[#allocation2 + $0x38] sm:$0xff]
    %v51 = vld [vmem:[#allocation2 + $0x40] sm:$0xff]
    %v52 = vld [vmem:[#allocation2 + $0x48] sm:$0xff]
    %v53 = vld [vmem:[#allocation2 + $0x50] sm:$0xff]
    %v54 = vld [vmem:[#allocation2 + $0x58] sm:$0xff]
    %v55 = vld [vmem:[#allocation2 + $0x60] sm:$0xff]
    %v56 = vld [vmem:[#allocation2 + $0x68] sm:$0xff]
    %v57 = vld [vmem:[#allocation2 + $0x70] sm:$0xff]
    %v58 = vld [vmem:[#allocation2 + $0x78] sm:$0xff]
    %v59 = vld [vmem:[#allocation2 + $0x80] sm:$0xff]
    %v60 = vld [vmem:[#allocation2 + $0x88] sm:$0xff]
    %v61 = vld [vmem:[#allocation2 + $0x90] sm:$0xff]
    %v62 = vld [vmem:[#allocation2 + $0x98] sm:$0xff]
    %v63 = vld [vmem:[#allocation2 + $0xa0] sm:$0xff]
    %v64 = vld [vmem:[#allocation2 + $0xa8] sm:$0xff]
    %v65 = vld [vmem:[#allocation2 + $0xb0] sm:$0xff]
    %v66 = vld [vmem:[#allocation2 + $0xb8] sm:$0xff]
    %v67 = vld [vmem:[#allocation2 + $0xc0] sm:$0xff]
    %v68 = vld [vmem:[#allocation2 + $0xc8] sm:$0xff]
    %v69 = vld [vmem:[#allocation2 + $0xd0] sm:$0xff]
    %v70 = vld [vmem:[#allocation2 + $0xd8] sm:$0xff]
    %v71 = vld [vmem:[#allocation2 + $0xe0] sm:$0xff]
    %v72 = vld [vmem:[#allocation2 + $0xe8] sm:$0xff]
    %v73 = vld [vmem:[#allocation2 + $0xf0] sm:$0xff]
    %v74 = vld [vmem:[#allocation2 + $0xf8] sm:$0xff]
    %v75 = vld [vmem:[#allocation2 + $0x100] sm:$0xff]
    %v76 = vld [vmem:[#allocation2 + $0x108] sm:$0xff]
    %v77 = vld [vmem:[#allocation2 + $0x110] sm:$0xff]
    %v78 = vld [vmem:[#allocation2 + $0x118] sm:$0xff]
    %v79 = vld [vmem:[#allocation2 + $0x120] sm:$0xff]
    %v80 = vld [vmem:[#allocation2 + $0x128] sm:$0xff]
    %v81 = vld [vmem:[#allocation2 + $0x130] sm:$0xff]
    %v82 = vld [vmem:[#allocation2 + $0x138] sm:$0xff]
    %v83 = vld [vmem:[#allocation2 + $0x140] sm:$0xff]
    %v84 = vld [vmem:[#allocation2 + $0x148] sm:$0xff]
    %v85 = vld [vmem:[#allocation2 + $0x150] sm:$0xff]
    %v86 = vld [vmem:[#allocation2 + $0x158] sm:$0xff]
    %v87 = vld [vmem:[#allocation2 + $0x160] sm:$0xff]
    %v88 = vld [vmem:[#allocation2 + $0x168] sm:$0xff]
    %v89 = vld [vmem:[#allocation2 + $0x170] sm:$0xff]
    %v90 = vld [vmem:[#allocation2 + $0x178] sm:$0xff]
    %v91 = vld [vmem:[#allocation2 + $0x180] sm:$0xff]
    %v92 = vld [vmem:[#allocation2 + $0x188] sm:$0xff]
    %v93 = vld [vmem:[#allocation2 + $0x190] sm:$0xff]
    %v94 = vld [vmem:[#allocation2 + $0x198] sm:$0xff]
    %v95 = vld [vmem:[#allocation2 + $0x1a0] sm:$0xff]
    %v96 = vld [vmem:[#allocation2 + $0x1a8] sm:$0xff]
    %v97 = vld [vmem:[#allocation2 + $0x1b0] sm:$0xff]
    %v98 = vld [vmem:[#allocation2 + $0x1b8] sm:$0xff]
    %v99 = vld [vmem:[#allocation2 + $0x1c0] sm:$0xff]
    %v100 = vld [vmem:[#allocation2 + $0x1c8] sm:$0xff]
    %v101 = vld [vmem:[#allocation2 + $0x1d0] sm:$0xff]
    %v102 = vld [vmem:[#allocation2 + $0x1d8] sm:$0xff]
    %v103 = vld [vmem:[#allocation2 + $0x1e0] sm:$0xff]
    %v104 = vld [vmem:[#allocation2 + $0x1e8] sm:$0xff]
    %v105 = vld [vmem:[#allocation2 + $0x1f0] sm:$0xff]
    %v106 = vld [vmem:[#allocation2 + $0x1f8] sm:$0xff]
    %v107 = vld [vmem:[#allocation2 + $0x200] sm:$0xff]
    %v108 = vld [vmem:[#allocation2 + $0x208] sm:$0xff]
    %v109 = vld [vmem:[#allocation2 + $0x210] sm:$0xff]
    %v110 = vld [vmem:[#allocation2 + $0x218] sm:$0xff]
    %v111 = vld [vmem:[#allocation2 + $0x220] sm:$0xff]
    %v112 = vld [vmem:[#allocation2 + $0x228] sm:$0xff]
    %v113 = vld [vmem:[#allocation2 + $0x230] sm:$0xff]
    %v114 = vld [vmem:[#allocation2 + $0x238] sm:$0xff]
    %v115 = vld [vmem:[#allocation2 + $0x240] sm:$0xff]
    %v116 = vld [vmem:[#allocation2 + $0x248] sm:$0xff]
    %v117 = vld [vmem:[#allocation2 + $0x250] sm:$0xff]
    %v118 = vld [vmem:[#allocation2 + $0x258] sm:$0xff]
    %v119 = vld [vmem:[#allocation2 + $0x260] sm:$0xff]
    %v120 = vld [vmem:[#allocation2 + $0x268] sm:$0xff]
    %v121 = vld [vmem:[#allocation2 + $0x270] sm:$0xff]
    %v122 = vld [vmem:[#allocation2 + $0x278] sm:$0xff]
    %v123 = vld [vmem:[#allocation2 + $0x280] sm:$0xff]
    %v124 = vld [vmem:[#allocation2 + $0x288] sm:$0xff]
    %v125 = vld [vmem:[#allocation2 + $0x290] sm:$0xff]
    %v126 = vld [vmem:[#allocation2 + $0x298] sm:$0xff]
    %v127 = vld [vmem:[#allocation2 + $0x2a0] sm:$0xff]
    %v128 = vld [vmem:[#allocation2 + $0x2a8] sm:$0xff]
    %v129 = vld [vmem:[#allocation2 + $0x2b0] sm:$0xff]
    %v130 = vld [vmem:[#allocation2 + $0x2b8] sm:$0xff]
    %v131 = vld [vmem:[#allocation2 + $0x2c0] sm:$0xff]
    %v132 = vld [vmem:[#allocation2 + $0x2c8] sm:$0xff]
    %v133 = vld [vmem:[#allocation2 + $0x2d0] sm:$0xff]
    %v134 = vld [vmem:[#allocation2 + $0x2d8] sm:$0xff]
    %v135 = vld [vmem:[#allocation2 + $0x2e0] sm:$0xff]
    %v136 = vld [vmem:[#allocation2 + $0x2e8] sm:$0xff]
    %v137 = vld [vmem:[#allocation2 + $0x2f0] sm:$0xff]
    %v138 = vld [vmem:[#allocation2 + $0x2f8] sm:$0xff]
    %v139 = vld [vmem:[#allocation2 + $0x300] sm:$0xff]
    %v140 = vld [vmem:[#allocation2 + $0x308] sm:$0xff]
    %v141 = vld [vmem:[#allocation2 + $0x310] sm:$0xff]
    %v142 = vld [vmem:[#allocation2 + $0x318] sm:$0xff]
    %v143 = vld [vmem:[#allocation2 + $0x320] sm:$0xff]
    %v144 = vld [vmem:[#allocation2 + $0x328] sm:$0xff]
    %v145 = vld [vmem:[#allocation2 + $0x330] sm:$0xff]
    %v146 = vld [vmem:[#allocation2 + $0x338] sm:$0xff]
    %v147 = vld [vmem:[#allocation2 + $0x340] sm:$0xff]
    %v148 = vld [vmem:[#allocation2 + $0x348] sm:$0xff]
    %v149 = vld [vmem:[#allocation2 + $0x350] sm:$0xff]
    %v150 = vld [vmem:[#allocation2 + $0x358] sm:$0xff]
    %v151 = vld [vmem:[#allocation2 + $0x360] sm:$0xff]
    %v152 = vld [vmem:[#allocation2 + $0x368] sm:$0xff]
    %v153 = vld [vmem:[#allocation2 + $0x370] sm:$0xff]
    %v154 = vld [vmem:[#allocation2 + $0x378] sm:$0xff]
    %v155 = vld [vmem:[#allocation2 + $0x380] sm:$0xff]
    %v156 = vld [vmem:[#allocation2 + $0x388] sm:$0xff]
    %v157 = vld [vmem:[#allocation2 + $0x390] sm:$0xff]
    %v158 = vld [vmem:[#allocation2 + $0x398] sm:$0xff]
    %v159 = vld [vmem:[#allocation2 + $0x3a0] sm:$0xff]
    %v160 = vld [vmem:[#allocation2 + $0x3a8] sm:$0xff]
    %v161 = vld [vmem:[#allocation2 + $0x3b0] sm:$0xff]
    %v162 = vld [vmem:[#allocation2 + $0x3b8] sm:$0xff]
    %v163 = vld [vmem:[#allocation2 + $0x3c0] sm:$0xff]
    %v164 = vld [vmem:[#allocation2 + $0x3c8] sm:$0xff]
    %v165 = vld [vmem:[#allocation2 + $0x3d0] sm:$0xff]
    %v166 = vld [vmem:[#allocation2 + $0x3d8] sm:$0xff]
    %v167 = vld [vmem:[#allocation2 + $0x3e0] sm:$0xff]
    %v168 = vld [vmem:[#allocation2 + $0x3e8] sm:$0xff]
    %v169 = vld [vmem:[#allocation2 + $0x3f0] sm:$0xff]
    %v170 = vld [vmem:[#allocation2 + $0x3f8] sm:$0xff]
    %v171 = vadd.f32 %v43, %v44
    %172 = vadd.xlane.f32.xlu0 %v171
    %v173 = vpop.xlane.xlu0 %172
    %v174 = vadd.f32 %v45, %v46
    %175 = vadd.xlane.f32.xlu0 %v174
    %v176 = vpop.xlane.xlu0 %175
    %v177 = vadd.f32 %v47, %v48
    %178 = vadd.xlane.f32.xlu0 %v177
    %v179 = vpop.xlane.xlu0 %178
    %v180 = vadd.f32 %v49, %v50
    %181 = vadd.xlane.f32.xlu0 %v180
    %v182 = vpop.xlane.xlu0 %181
    %v183 = vadd.f32 %v51, %v52
    %184 = vadd.xlane.f32.xlu0 %v183
    %v185 = vpop.xlane.xlu0 %184
    %v186 = vadd.f32 %v53, %v54
    %187 = vadd.xlane.f32.xlu0 %v186
    %v188 = vpop.xlane.xlu0 %187
    %v189 = vadd.f32 %v55, %v56
    %190 = vadd.xlane.f32.xlu0 %v189
    %v191 = vpop.xlane.xlu0 %190
    %v192 = vadd.f32 %v57, %v58
    %193 = vadd.xlane.f32.xlu0 %v192
    %v194 = vpop.xlane.xlu0 %193
    %v195 = vadd.f32 %v59, %v60
    %196 = vadd.xlane.f32.xlu0 %v195
    %v197 = vpop.xlane.xlu0 %196
    %v198 = vadd.f32 %v61, %v62
    %199 = vadd.xlane.f32.xlu0 %v198
    %v200 = vpop.xlane.xlu0 %199
    %v201 = vadd.f32 %v63, %v64
    %202 = vadd.xlane.f32.xlu0 %v201
    %v203 = vpop.xlane.xlu0 %202
    %v204 = vadd.f32 %v65, %v66
    %205 = vadd.xlane.f32.xlu0 %v204
    %v206 = vpop.xlane.xlu0 %205
    %v207 = vadd.f32 %v67, %v68
    %208 = vadd.xlane.f32.xlu0 %v207
    %v209 = vpop.xlane.xlu0 %208
    %v210 = vadd.f32 %v69, %v70
    %211 = vadd.xlane.f32.xlu0 %v210
    %v212 = vpop.xlane.xlu0 %211
    %v213 = vadd.f32 %v71, %v72
    %214 = vadd.xlane.f32.xlu0 %v213
    %v215 = vpop.xlane.xlu0 %214
    %v216 = vadd.f32 %v73, %v74
    %217 = vadd.xlane.f32.xlu0 %v216
    %v218 = vpop.xlane.xlu0 %217
    %v219 = vadd.f32 %v75, %v76
    %220 = vadd.xlane.f32.xlu0 %v219
    %v221 = vpop.xlane.xlu0 %220
    %v222 = vadd.f32 %v77, %v78
    %223 = vadd.xlane.f32.xlu0 %v222
    %v224 = vpop.xlane.xlu0 %223
    %v225 = vadd.f32 %v79, %v80
    %226 = vadd.xlane.f32.xlu0 %v225
    %v227 = vpop.xlane.xlu0 %226
    %v228 = vadd.f32 %v81, %v82
    %229 = vadd.xlane.f32.xlu0 %v228
    %v230 = vpop.xlane.xlu0 %229
    %v231 = vadd.f32 %v83, %v84
    %232 = vadd.xlane.f32.xlu0 %v231
    %v233 = vpop.xlane.xlu0 %232
    %v234 = vadd.f32 %v85, %v86
    %235 = vadd.xlane.f32.xlu0 %v234
    %v236 = vpop.xlane.xlu0 %235
    %v237 = vadd.f32 %v87, %v88
    %238 = vadd.xlane.f32.xlu0 %v237
    %v239 = vpop.xlane.xlu0 %238
    %v240 = vadd.f32 %v89, %v90
    %241 = vadd.xlane.f32.xlu0 %v240
    %v242 = vpop.xlane.xlu0 %241
    %v243 = vadd.f32 %v91, %v92
    %244 = vadd.xlane.f32.xlu0 %v243
    %v245 = vpop.xlane.xlu0 %244
    %v246 = vadd.f32 %v93, %v94
    %247 = vadd.xlane.f32.xlu0 %v246
    %v248 = vpop.xlane.xlu0 %247
    %v249 = vadd.f32 %v95, %v96
    %250 = vadd.xlane.f32.xlu0 %v249
    %v251 = vpop.xlane.xlu0 %250
    %v252 = vadd.f32 %v97, %v98
    %253 = vadd.xlane.f32.xlu0 %v252
    %v254 = vpop.xlane.xlu0 %253
    %v255 = vadd.f32 %v99, %v100
    %256 = vadd.xlane.f32.xlu0 %v255
    %v257 = vpop.xlane.xlu0 %256
    %v258 = vadd.f32 %v101, %v102
    %259 = vadd.xlane.f32.xlu0 %v258
    %v260 = vpop.xlane.xlu0 %259
    %v261 = vadd.f32 %v103, %v104
    %262 = vadd.xlane.f32.xlu0 %v261
    %v263 = vpop.xlane.xlu0 %262
    %v264 = vadd.f32 %v105, %v106
    %265 = vadd.xlane.f32.xlu0 %v264
    %v266 = vpop.xlane.xlu0 %265
    %v267 = vadd.f32 %v107, %v108
    %268 = vadd.xlane.f32.xlu0 %v267
    %v269 = vpop.xlane.xlu0 %268
    %v270 = vadd.f32 %v109, %v110
    %271 = vadd.xlane.f32.xlu0 %v270
    %v272 = vpop.xlane.xlu0 %271
    %v273 = vadd.f32 %v111, %v112
    %274 = vadd.xlane.f32.xlu0 %v273
    %v275 = vpop.xlane.xlu0 %274
    %v276 = vadd.f32 %v113, %v114
    %277 = vadd.xlane.f32.xlu0 %v276
    %v278 = vpop.xlane.xlu0 %277
    %v279 = vadd.f32 %v115, %v116
    %280 = vadd.xlane.f32.xlu0 %v279
    %v281 = vpop.xlane.xlu0 %280
    %v282 = vadd.f32 %v117, %v118
    %283 = vadd.xlane.f32.xlu0 %v282
    %v284 = vpop.xlane.xlu0 %283
    %v285 = vadd.f32 %v119, %v120
    %286 = vadd.xlane.f32.xlu0 %v285
    %v287 = vpop.xlane.xlu0 %286
    %v288 = vadd.f32 %v121, %v122
    %289 = vadd.xlane.f32.xlu0 %v288
    %v290 = vpop.xlane.xlu0 %289
    %v291 = vadd.f32 %v123, %v124
    %292 = vadd.xlane.f32.xlu0 %v291
    %v293 = vpop.xlane.xlu0 %292
    %v294 = vadd.f32 %v125, %v126
    %295 = vadd.xlane.f32.xlu0 %v294
    %v296 = vpop.xlane.xlu0 %295
    %v297 = vadd.f32 %v127, %v128
    %298 = vadd.xlane.f32.xlu0 %v297
    %v299 = vpop.xlane.xlu0 %298
    %v300 = vadd.f32 %v129, %v130
    %301 = vadd.xlane.f32.xlu0 %v300
    %v302 = vpop.xlane.xlu0 %301
    %v303 = vadd.f32 %v131, %v132
    %304 = vadd.xlane.f32.xlu0 %v303
    %v305 = vpop.xlane.xlu0 %304
    %v306 = vadd.f32 %v133, %v134
    %307 = vadd.xlane.f32.xlu0 %v306
    %v308 = vpop.xlane.xlu0 %307
    %v309 = vadd.f32 %v135, %v136
    %310 = vadd.xlane.f32.xlu0 %v309
    %v311 = vpop.xlane.xlu0 %310
    %v312 = vadd.f32 %v137, %v138
    %313 = vadd.xlane.f32.xlu0 %v312
    %v314 = vpop.xlane.xlu0 %313
    %v315 = vadd.f32 %v139, %v140
    %316 = vadd.xlane.f32.xlu0 %v315
    %v317 = vpop.xlane.xlu0 %316
    %v318 = vadd.f32 %v141, %v142
    %319 = vadd.xlane.f32.xlu0 %v318
    %v320 = vpop.xlane.xlu0 %319
    %v321 = vadd.f32 %v143, %v144
    %322 = vadd.xlane.f32.xlu0 %v321
    %v323 = vpop.xlane.xlu0 %322
    %v324 = vadd.f32 %v145, %v146
    %325 = vadd.xlane.f32.xlu0 %v324
    %v326 = vpop.xlane.xlu0 %325
    %v327 = vadd.f32 %v147, %v148
    %328 = vadd.xlane.f32.xlu0 %v327
    %v329 = vpop.xlane.xlu0 %328
    %v330 = vadd.f32 %v149, %v150
    %331 = vadd.xlane.f32.xlu0 %v330
    %v332 = vpop.xlane.xlu0 %331
    %v333 = vadd.f32 %v151, %v152
    %334 = vadd.xlane.f32.xlu0 %v333
    %v335 = vpop.xlane.xlu0 %334
    %v336 = vadd.f32 %v153, %v154
    %337 = vadd.xlane.f32.xlu0 %v336
    %v338 = vpop.xlane.xlu0 %337
    %v339 = vadd.f32 %v155, %v156
    %340 = vadd.xlane.f32.xlu0 %v339
    %v341 = vpop.xlane.xlu0 %340
    %v342 = vadd.f32 %v157, %v158
    %343 = vadd.xlane.f32.xlu0 %v342
    %v344 = vpop.xlane.xlu0 %343
    %v345 = vadd.f32 %v159, %v160
    %346 = vadd.xlane.f32.xlu0 %v345
    %v347 = vpop.xlane.xlu0 %346
    %v348 = vadd.f32 %v161, %v162
    %349 = vadd.xlane.f32.xlu0 %v348
    %v350 = vpop.xlane.xlu0 %349
    %v351 = vadd.f32 %v163, %v164
    %352 = vadd.xlane.f32.xlu0 %v351
    %v353 = vpop.xlane.xlu0 %352
    %v354 = vadd.f32 %v165, %v166
    %355 = vadd.xlane.f32.xlu0 %v354
    %v356 = vpop.xlane.xlu0 %355
    %v357 = vadd.f32 %v167, %v168
    %358 = vadd.xlane.f32.xlu0 %v357
    %v359 = vpop.xlane.xlu0 %358
    %v360 = vadd.f32 %v169, %v170
    %361 = vadd.xlane.f32.xlu0 %v360
    %v362 = vpop.xlane.xlu0 %361
    %v363 = vmul.f32 %v173, 0.00390625
    %v364 = vmul.f32 %v176, 0.00390625
    %v365 = vmul.f32 %v179, 0.00390625
    %v366 = vmul.f32 %v182, 0.00390625
    %v367 = vmul.f32 %v185, 0.00390625
    %v368 = vmul.f32 %v188, 0.00390625
    %v369 = vmul.f32 %v191, 0.00390625
    %v370 = vmul.f32 %v194, 0.00390625
    %v371 = vmul.f32 %v197, 0.00390625
    %v372 = vmul.f32 %v200, 0.00390625
    %v373 = vmul.f32 %v203, 0.00390625
    %v374 = vmul.f32 %v206, 0.00390625
    %v375 = vmul.f32 %v209, 0.00390625
    %v376 = vmul.f32 %v212, 0.00390625
    %v377 = vmul.f32 %v215, 0.00390625
    %v378 = vmul.f32 %v218, 0.00390625
    %v379 = vmul.f32 %v221, 0.00390625
    %v380 = vmul.f32 %v224, 0.00390625
    %v381 = vmul.f32 %v227, 0.00390625
    %v382 = vmul.f32 %v230, 0.00390625
    %v383 = vmul.f32 %v233, 0.00390625
    %v384 = vmul.f32 %v236, 0.00390625
    %v385 = vmul.f32 %v239, 0.00390625
    %v386 = vmul.f32 %v242, 0.00390625
    %v387 = vmul.f32 %v245, 0.00390625
    %v388 = vmul.f32 %v248, 0.00390625
    %v389 = vmul.f32 %v251, 0.00390625
    %v390 = vmul.f32 %v254, 0.00390625
    %v391 = vmul.f32 %v257, 0.00390625
    %v392 = vmul.f32 %v260, 0.00390625
    %v393 = vmul.f32 %v263, 0.00390625
    %v394 = vmul.f32 %v266, 0.00390625
    %v395 = vmul.f32 %v269, 0.00390625
    %v396 = vmul.f32 %v272, 0.00390625
    %v397 = vmul.f32 %v275, 0.00390625
    %v398 = vmul.f32 %v278, 0.00390625
    %v399 = vmul.f32 %v281, 0.00390625
    %v400 = vmul.f32 %v284, 0.00390625
    %v401 = vmul.f32 %v287, 0.00390625
    %v402 = vmul.f32 %v290, 0.00390625
    %v403 = vmul.f32 %v293, 0.00390625
    %v404 = vmul.f32 %v296, 0.00390625
    %v405 = vmul.f32 %v299, 0.00390625
    %v406 = vmul.f32 %v302, 0.00390625
    %v407 = vmul.f32 %v305, 0.00390625
    %v408 = vmul.f32 %v308, 0.00390625
    %v409 = vmul.f32 %v311, 0.00390625
    %v410 = vmul.f32 %v314, 0.00390625
    %v411 = vmul.f32 %v317, 0.00390625
    %v412 = vmul.f32 %v320, 0.00390625
    %v413 = vmul.f32 %v323, 0.00390625
    %v414 = vmul.f32 %v326, 0.00390625
    %v415 = vmul.f32 %v329, 0.00390625
    %v416 = vmul.f32 %v332, 0.00390625
    %v417 = vmul.f32 %v335, 0.00390625
    %v418 = vmul.f32 %v338, 0.00390625
    %v419 = vmul.f32 %v341, 0.00390625
    %v420 = vmul.f32 %v344, 0.00390625
    %v421 = vmul.f32 %v347, 0.00390625
    %v422 = vmul.f32 %v350, 0.00390625
    %v423 = vmul.f32 %v353, 0.00390625
    %v424 = vmul.f32 %v356, 0.00390625
    %v425 = vmul.f32 %v359, 0.00390625
    %v426 = vmul.f32 %v362, 0.00390625
    %v459 = vlaneseq
    %v460 = vand.u32 %v459, 127
    %v461 = vlaneseq
    %v462 = vshrl.u32 %v461, 7
    %v463 = vsub.s32 %v460, %v462
    %v464 = vrot.slane %v363, %v463
    %v465 = vlaneseq
    %v466 = vshrl.u32 %v465, 7
    %v467 = vsub.s32 %v460, %v466
    %v468 = vrot.slane %v364, %v467
    %v469 = vlaneseq
    %v470 = vshrl.u32 %v469, 7
    %v471 = vsub.s32 %v460, %v470
    %v472 = vrot.slane %v365, %v471
    %v473 = vlaneseq
    %v474 = vshrl.u32 %v473, 7
    %v475 = vsub.s32 %v460, %v474
    %v476 = vrot.slane %v366, %v475
    %v477 = vlaneseq
    %v478 = vshrl.u32 %v477, 7
    %v479 = vsub.s32 %v460, %v478
    %v480 = vrot.slane %v367, %v479
    %v481 = vlaneseq
    %v482 = vshrl.u32 %v481, 7
    %v483 = vsub.s32 %v460, %v482
    %v484 = vrot.slane %v368, %v483
    %v485 = vlaneseq
    %v486 = vshrl.u32 %v485, 7
    %v487 = vsub.s32 %v460, %v486
    %v488 = vrot.slane %v369, %v487
    %v489 = vlaneseq
    %v490 = vshrl.u32 %v489, 7
    %v491 = vsub.s32 %v460, %v490
    %v492 = vrot.slane %v370, %v491
    %v493 = vlaneseq
    %v494 = vshrl.u32 %v493, 7
    %v495 = vsub.s32 %v460, %v494
    %v496 = vrot.slane %v371, %v495
    %v497 = vlaneseq
    %v498 = vshrl.u32 %v497, 7
    %v499 = vsub.s32 %v460, %v498
    %v500 = vrot.slane %v372, %v499
    %v501 = vlaneseq
    %v502 = vshrl.u32 %v501, 7
    %v503 = vsub.s32 %v460, %v502
    %v504 = vrot.slane %v373, %v503
    %v505 = vlaneseq
    %v506 = vshrl.u32 %v505, 7
    %v507 = vsub.s32 %v460, %v506
    %v508 = vrot.slane %v374, %v507
    %v509 = vlaneseq
    %v510 = vshrl.u32 %v509, 7
    %v511 = vsub.s32 %v460, %v510
    %v512 = vrot.slane %v375, %v511
    %v513 = vlaneseq
    %v514 = vshrl.u32 %v513, 7
    %v515 = vsub.s32 %v460, %v514
    %v516 = vrot.slane %v376, %v515
    %v517 = vlaneseq
    %v518 = vshrl.u32 %v517, 7
    %v519 = vsub.s32 %v460, %v518
    %v520 = vrot.slane %v377, %v519
    %v521 = vlaneseq
    %v522 = vshrl.u32 %v521, 7
    %v523 = vsub.s32 %v460, %v522
    %v524 = vrot.slane %v378, %v523
    %v525 = vlaneseq
    %v526 = vshrl.u32 %v525, 7
    %v527 = vsub.s32 %v460, %v526
    %v528 = vrot.slane %v379, %v527
    %v529 = vlaneseq
    %v530 = vshrl.u32 %v529, 7
    %v531 = vsub.s32 %v460, %v530
    %v532 = vrot.slane %v380, %v531
    %v533 = vlaneseq
    %v534 = vshrl.u32 %v533, 7
    %v535 = vsub.s32 %v460, %v534
    %v536 = vrot.slane %v381, %v535
    %v537 = vlaneseq
    %v538 = vshrl.u32 %v537, 7
    %v539 = vsub.s32 %v460, %v538
    %v540 = vrot.slane %v382, %v539
    %v541 = vlaneseq
    %v542 = vshrl.u32 %v541, 7
    %v543 = vsub.s32 %v460, %v542
    %v544 = vrot.slane %v383, %v543
    %v545 = vlaneseq
    %v546 = vshrl.u32 %v545, 7
    %v547 = vsub.s32 %v460, %v546
    %v548 = vrot.slane %v384, %v547
    %v549 = vlaneseq
    %v550 = vshrl.u32 %v549, 7
    %v551 = vsub.s32 %v460, %v550
    %v552 = vrot.slane %v385, %v551
    %v553 = vlaneseq
    %v554 = vshrl.u32 %v553, 7
    %v555 = vsub.s32 %v460, %v554
    %v556 = vrot.slane %v386, %v555
    %v557 = vlaneseq
    %v558 = vshrl.u32 %v557, 7
    %v559 = vsub.s32 %v460, %v558
    %v560 = vrot.slane %v387, %v559
    %v561 = vlaneseq
    %v562 = vshrl.u32 %v561, 7
    %v563 = vsub.s32 %v460, %v562
    %v564 = vrot.slane %v388, %v563
    %v565 = vlaneseq
    %v566 = vshrl.u32 %v565, 7
    %v567 = vsub.s32 %v460, %v566
    %v568 = vrot.slane %v389, %v567
    %v569 = vlaneseq
    %v570 = vshrl.u32 %v569, 7
    %v571 = vsub.s32 %v460, %v570
    %v572 = vrot.slane %v390, %v571
    %v573 = vlaneseq
    %v574 = vshrl.u32 %v573, 7
    %v575 = vsub.s32 %v460, %v574
    %v576 = vrot.slane %v391, %v575
    %v577 = vlaneseq
    %v578 = vshrl.u32 %v577, 7
    %v579 = vsub.s32 %v460, %v578
    %v580 = vrot.slane %v392, %v579
    %v581 = vlaneseq
    %v582 = vshrl.u32 %v581, 7
    %v583 = vsub.s32 %v460, %v582
    %v584 = vrot.slane %v393, %v583
    %v585 = vlaneseq
    %v586 = vshrl.u32 %v585, 7
    %v587 = vsub.s32 %v460, %v586
    %v588 = vrot.slane %v394, %v587
    %vm589 = vcmask 1041409
    %v590 = vsel %vm589, %v468, %v464
    %vm591 = vcmask 1042434
    %v592 = vsel %vm591, %v472, %v590
    %vm593 = vcmask 1043459
    %v594 = vsel %vm593, %v476, %v592
    %vm595 = vcmask 1044484
    %v596 = vsel %vm595, %v480, %v594
    %vm597 = vcmask 1045509
    %v598 = vsel %vm597, %v484, %v596
    %vm599 = vcmask 1046534
    %v600 = vsel %vm599, %v488, %v598
    %vm601 = vcmask 1047559
    %v602 = vsel %vm601, %v492, %v600
    %v603 = vsel %vm589, %v500, %v496
    %v604 = vsel %vm591, %v504, %v603
    %v605 = vsel %vm593, %v508, %v604
    %v606 = vsel %vm595, %v512, %v605
    %v607 = vsel %vm597, %v516, %v606
    %v608 = vsel %vm599, %v520, %v607
    %v609 = vsel %vm601, %v524, %v608
    %v610 = vsel %vm589, %v532, %v528
    %v611 = vsel %vm591, %v536, %v610
    %v612 = vsel %vm593, %v540, %v611
    %v613 = vsel %vm595, %v544, %v612
    %v614 = vsel %vm597, %v548, %v613
    %v615 = vsel %vm599, %v552, %v614
    %v616 = vsel %vm601, %v556, %v615
    %v617 = vsel %vm589, %v564, %v560
    %v618 = vsel %vm591, %v568, %v617
    %v619 = vsel %vm593, %v572, %v618
    %v620 = vsel %vm595, %v576, %v619
    %v621 = vsel %vm597, %v580, %v620
    %v622 = vsel %vm599, %v584, %v621
    %v623 = vsel %vm601, %v588, %v622
    %v660 = vadd.s32 %v460, 4294967288
    %v661 = vlaneseq
    %v662 = vshrl.u32 %v661, 7
    %v663 = vsub.s32 %v660, %v662
    %v664 = vrot.slane %v395, %v663
    %v665 = vlaneseq
    %v666 = vshrl.u32 %v665, 7
    %v667 = vsub.s32 %v660, %v666
    %v668 = vrot.slane %v396, %v667
    %v669 = vlaneseq
    %v670 = vshrl.u32 %v669, 7
    %v671 = vsub.s32 %v660, %v670
    %v672 = vrot.slane %v397, %v671
    %v673 = vlaneseq
    %v674 = vshrl.u32 %v673, 7
    %v675 = vsub.s32 %v660, %v674
    %v676 = vrot.slane %v398, %v675
    %v677 = vlaneseq
    %v678 = vshrl.u32 %v677, 7
    %v679 = vsub.s32 %v660, %v678
    %v680 = vrot.slane %v399, %v679
    %v681 = vlaneseq
    %v682 = vshrl.u32 %v681, 7
    %v683 = vsub.s32 %v660, %v682
    %v684 = vrot.slane %v400, %v683
    %v685 = vlaneseq
    %v686 = vshrl.u32 %v685, 7
    %v687 = vsub.s32 %v660, %v686
    %v688 = vrot.slane %v401, %v687
    %v689 = vlaneseq
    %v690 = vshrl.u32 %v689, 7
    %v691 = vsub.s32 %v660, %v690
    %v692 = vrot.slane %v402, %v691
    %v693 = vlaneseq
    %v694 = vshrl.u32 %v693, 7
    %v695 = vsub.s32 %v660, %v694
    %v696 = vrot.slane %v403, %v695
    %v697 = vlaneseq
    %v698 = vshrl.u32 %v697, 7
    %v699 = vsub.s32 %v660, %v698
    %v700 = vrot.slane %v404, %v699
    %v701 = vlaneseq
    %v702 = vshrl.u32 %v701, 7
    %v703 = vsub.s32 %v660, %v702
    %v704 = vrot.slane %v405, %v703
    %v705 = vlaneseq
    %v706 = vshrl.u32 %v705, 7
    %v707 = vsub.s32 %v660, %v706
    %v708 = vrot.slane %v406, %v707
    %v709 = vlaneseq
    %v710 = vshrl.u32 %v709, 7
    %v711 = vsub.s32 %v660, %v710
    %v712 = vrot.slane %v407, %v711
    %v713 = vlaneseq
    %v714 = vshrl.u32 %v713, 7
    %v715 = vsub.s32 %v660, %v714
    %v716 = vrot.slane %v408, %v715
    %v717 = vlaneseq
    %v718 = vshrl.u32 %v717, 7
    %v719 = vsub.s32 %v660, %v718
    %v720 = vrot.slane %v409, %v719
    %v721 = vlaneseq
    %v722 = vshrl.u32 %v721, 7
    %v723 = vsub.s32 %v660, %v722
    %v724 = vrot.slane %v410, %v723
    %v725 = vlaneseq
    %v726 = vshrl.u32 %v725, 7
    %v727 = vsub.s32 %v660, %v726
    %v728 = vrot.slane %v411, %v727
    %v729 = vlaneseq
    %v730 = vshrl.u32 %v729, 7
    %v731 = vsub.s32 %v660, %v730
    %v732 = vrot.slane %v412, %v731
    %v733 = vlaneseq
    %v734 = vshrl.u32 %v733, 7
    %v735 = vsub.s32 %v660, %v734
    %v736 = vrot.slane %v413, %v735
    %v737 = vlaneseq
    %v738 = vshrl.u32 %v737, 7
    %v739 = vsub.s32 %v660, %v738
    %v740 = vrot.slane %v414, %v739
    %v741 = vlaneseq
    %v742 = vshrl.u32 %v741, 7
    %v743 = vsub.s32 %v660, %v742
    %v744 = vrot.slane %v415, %v743
    %v745 = vlaneseq
    %v746 = vshrl.u32 %v745, 7
    %v747 = vsub.s32 %v660, %v746
    %v748 = vrot.slane %v416, %v747
    %v749 = vlaneseq
    %v750 = vshrl.u32 %v749, 7
    %v751 = vsub.s32 %v660, %v750
    %v752 = vrot.slane %v417, %v751
    %v753 = vlaneseq
    %v754 = vshrl.u32 %v753, 7
    %v755 = vsub.s32 %v660, %v754
    %v756 = vrot.slane %v418, %v755
    %v757 = vlaneseq
    %v758 = vshrl.u32 %v757, 7
    %v759 = vsub.s32 %v660, %v758
    %v760 = vrot.slane %v419, %v759
    %v761 = vlaneseq
    %v762 = vshrl.u32 %v761, 7
    %v763 = vsub.s32 %v660, %v762
    %v764 = vrot.slane %v420, %v763
    %v765 = vlaneseq
    %v766 = vshrl.u32 %v765, 7
    %v767 = vsub.s32 %v660, %v766
    %v768 = vrot.slane %v421, %v767
    %v769 = vlaneseq
    %v770 = vshrl.u32 %v769, 7
    %v771 = vsub.s32 %v660, %v770
    %v772 = vrot.slane %v422, %v771
    %v773 = vlaneseq
    %v774 = vshrl.u32 %v773, 7
    %v775 = vsub.s32 %v660, %v774
    %v776 = vrot.slane %v423, %v775
    %v777 = vlaneseq
    %v778 = vshrl.u32 %v777, 7
    %v779 = vsub.s32 %v660, %v778
    %v780 = vrot.slane %v424, %v779
    %v781 = vlaneseq
    %v782 = vshrl.u32 %v781, 7
    %v783 = vsub.s32 %v660, %v782
    %v784 = vrot.slane %v425, %v783
    %v785 = vlaneseq
    %v786 = vshrl.u32 %v785, 7
    %v787 = vsub.s32 %v660, %v786
    %v788 = vrot.slane %v426, %v787
    %v789 = vsel %vm589, %v668, %v664
    %v790 = vsel %vm591, %v672, %v789
    %v791 = vsel %vm593, %v676, %v790
    %v792 = vsel %vm595, %v680, %v791
    %v793 = vsel %vm597, %v684, %v792
    %v794 = vsel %vm599, %v688, %v793
    %v795 = vsel %vm601, %v692, %v794
    %v796 = vsel %vm589, %v700, %v696
    %v797 = vsel %vm591, %v704, %v796
    %v798 = vsel %vm593, %v708, %v797
    %v799 = vsel %vm595, %v712, %v798
    %v800 = vsel %vm597, %v716, %v799
    %v801 = vsel %vm599, %v720, %v800
    %v802 = vsel %vm601, %v724, %v801
    %v803 = vsel %vm589, %v732, %v728
    %v804 = vsel %vm591, %v736, %v803
    %v805 = vsel %vm593, %v740, %v804
    %v806 = vsel %vm595, %v744, %v805
    %v807 = vsel %vm597, %v748, %v806
    %v808 = vsel %vm599, %v752, %v807
    %v809 = vsel %vm601, %v756, %v808
    %v810 = vsel %vm589, %v764, %v760
    %v811 = vsel %vm591, %v768, %v810
    %v812 = vsel %vm593, %v772, %v811
    %v813 = vsel %vm595, %v776, %v812
    %v814 = vsel %vm597, %v780, %v813
    %v815 = vsel %vm599, %v784, %v814
    %v816 = vsel %vm601, %v788, %v815
    %vm821 = vcmask 64512
    %v822 = vsel %vm821, %v602, %v795
    %v823 = vsel %vm821, %v609, %v802
    %v824 = vsel %vm821, %v616, %v809
    %v825 = vsel %vm821, %v623, %v816
    %v826 = vld [vmem:[#allocation5] sm:$0xff]
    %v827 = vld [vmem:[#allocation5 + $0x8] sm:$0xff]
    %v828 = vld [vmem:[#allocation5 + $0x10] sm:$0xff]
    %v829 = vld [vmem:[#allocation5 + $0x18] sm:$0xff]
    %v830 = vld [vmem:[%s2] sm:$0x1]
    %v832 = vlaneseq
    %v833 = vshrl.u32 %v832, 7
    %v834 = vsub.s32 0, %v833
    %v835 = vrot.slane %v830, %v834
    %837 = vxpose.xlu0.b32.start [1/16] %v822, 128
    %838 = vxpose.xlu0.b32.cont [2/16] %v823, 128
    %839 = vxpose.xlu0.b32.cont [3/16] %v824, 128
    %840 = vxpose.xlu0.b32.cont [4/16] %v825, 128
    %841 = vxpose.xlu0.b32.cont [5/16] 0.0, 128
    %842 = vxpose.xlu0.b32.cont [6/16] 0.0, 128
    %843 = vxpose.xlu0.b32.cont [7/16] 0.0, 128
    %844 = vxpose.xlu0.b32.cont [8/16] 0.0, 128
    %845 = vxpose.xlu0.b32.cont [9/16] 0.0, 128
    %846 = vxpose.xlu0.b32.cont [10/16] 0.0, 128
    %847 = vxpose.xlu0.b32.cont [11/16] 0.0, 128
    %848 = vxpose.xlu0.b32.cont [12/16] 0.0, 128
    %849 = vxpose.xlu0.b32.cont [13/16] 0.0, 128
    %850 = vxpose.xlu0.b32.cont [14/16] 0.0, 128
    %851 = vxpose.xlu0.b32.cont [15/16] 0.0, 128
    %852 = vxpose.xlu0.b32.end [16/16] 0.0, 128
    %v853 = vpop.trf.xlu0
    %v854 = vpop.trf.xlu0
    %v855 = vpop.trf.xlu0
    %v856 = vpop.trf.xlu0
    %v857 = vpop.trf.xlu0
    %v858 = vpop.trf.xlu0
    %v859 = vpop.trf.xlu0
    %v860 = vpop.trf.xlu0
    %v861 = vpop.trf.xlu0
    %v862 = vpop.trf.xlu0
    %v863 = vpop.trf.xlu0
    %v864 = vpop.trf.xlu0
    %v865 = vpop.trf.xlu0
    %v866 = vpop.trf.xlu0
    %v867 = vpop.trf.xlu0
    %v868 = vpop.trf.xlu0
    %vm869 = vcmask 261120
    %v871 = vsel %vm869, %v853, 0
    %v874 = vsel %vm869, %v854, 0
    %876 = vmatprep.subr.mxu0 0.0
    %877 = vmatpush1.msra.mxu0 %v826
    %878 = vmatprep.subr.mxu0 0.0
    %879 = vmatpush1.msra.mxu0 %v827
    %880 = vmatprep.subr.mxu0 0.0
    %881 = vmatpush1.msra.mxu0 %v828
    %882 = vmatprep.subr.mxu0 0.0
    %883 = vmatpush1.msra.mxu0 %v829
    %884 = vmatprep.subr.mxu0 0.0
    %885 = vmatpush1.msra.mxu0 0.0
    %886 = vmatprep.subr.mxu0 0.0
    %887 = vmatpush1.msra.mxu0 0.0
    %888 = vmatprep.subr.mxu0 0.0
    %889 = vmatpush1.msra.mxu0 0.0
    %890 = vmatprep.subr.mxu0 0.0
    %891 = vmatpush1.msra.mxu0 0.0
    %892 = vmatprep.subr.mxu0 0.0
    %893 = vmatpush1.msra.mxu0 0.0
    %894 = vmatprep.subr.mxu0 0.0
    %895 = vmatpush1.msra.mxu0 0.0
    %896 = vmatprep.subr.mxu0 0.0
    %897 = vmatpush1.msra.mxu0 0.0
    %898 = vmatprep.subr.mxu0 0.0
    %899 = vmatpush1.msra.mxu0 0.0
    %900 = vmatprep.subr.mxu0 0.0
    %901 = vmatpush1.msra.mxu0 0.0
    %902 = vmatprep.subr.mxu0 0.0
    %903 = vmatpush1.msra.mxu0 0.0
    %904 = vmatprep.subr.mxu0 0.0
    %905 = vmatpush1.msra.mxu0 0.0
    %906 = vmatprep.subr.mxu0 0.0
    %907 = vmatpush1.msra.mxu0 0.0
    %908 = vmatprep.subr.mxu0 0.0
    %909 = vmatpush1.msra.mxu0 0.0
    %910 = vmatprep.subr.mxu0 0.0
    %911 = vmatpush1.msra.mxu0 0.0
    %912 = vmatprep.subr.mxu0 0.0
    %913 = vmatpush1.msra.mxu0 0.0
    %914 = vmatprep.subr.mxu0 0.0
    %915 = vmatpush1.msra.mxu0 0.0
    %916 = vmatprep.subr.mxu0 0.0
    %917 = vmatpush1.msra.mxu0 0.0
    %918 = vmatprep.subr.mxu0 0.0
    %919 = vmatpush1.msra.mxu0 0.0
    %920 = vmatprep.subr.mxu0 0.0
    %921 = vmatpush1.msra.mxu0 0.0
    %922 = vmatprep.subr.mxu0 0.0
    %923 = vmatpush1.msra.mxu0 0.0
    %924 = vmatprep.subr.mxu0 0.0
    %925 = vmatpush1.msra.mxu0 0.0
    %926 = vmatprep.subr.mxu0 0.0
    %927 = vmatpush1.msra.mxu0 0.0
    %928 = vmatprep.subr.mxu0 0.0
    %929 = vmatpush1.msra.mxu0 0.0
    %930 = vmatprep.subr.mxu0 0.0
    %931 = vmatpush1.msra.mxu0 0.0
    %932 = vmatprep.subr.mxu0 0.0
    %933 = vmatpush1.msra.mxu0 0.0
    %934 = vmatprep.subr.mxu0 0.0
    %935 = vmatpush1.msra.mxu0 0.0
    %936 = vmatprep.subr.mxu0 0.0
    %937 = vmatpush1.msra.mxu0 0.0
    %938 = vmatprep.subr.mxu0 0.0
    %939 = vmatpush1.msra.mxu0 0.0
    %940 = vmatprep.mubr.f32.mxu0 0.0
    %941 = vmatmul.mubr.f32.gmra.mrb[0].mxu0 %v871
    %v942 = vpop.f32.mrb[0].mxu0
    %v943 = vadd.f32 %v835, %v942
    %v944 = vpop.f32.mrb[0].mxu0
    %945 = vmatprep.mubr.f32.mxu0 0.0
    %946 = vmatmul.mubr.f32.gmra.mrb[0].mxu0 %v874
    %v947 = vpop.f32.mrb[0].mxu0
    %v948 = vadd.f32 %v835, %v947
    %v949 = vpop.f32.mrb[0].mxu0
    %950 = vdwg.mxu0
    %vm951 = vcmask 523264
    %952 = vst.msk [vmem:[#allocation7] sm:$0xff] %vm951, %v943
    %953 = vst.msk [vmem:[#allocation7 + $0x8] sm:$0xff] %vm951, %v948
    // Predicated region
    $region22: #{tpu_custom_call.1} parent=1 // pred_check
      _
    $region23: #{tpu_custom_call.1} parent=1 // pred_check_branch
      %955 = sbr.rel (0) target = $region25
    $region24: #{tpu_custom_call.1} parent=1 // pred_region
      %s957 = ssub.s32 256, 256
      %958 = vsyncadd [#allocation4], %s957
      %s959 = sshll.u32 [#allocation7], 4
      %s960 = int_to_ptr.vmem [resolvable:$true] %s959
      %965 = dma.vmem_to_hbm [thread:$0]  %s960, 256, %s3, [#allocation4], 128, 128, 8
    $region25: #{tpu_custom_call.1} parent=1 // pred_fallthru
      _
    // Predicated region
    $region26: #{tpu_custom_call.1} parent=1 // pred_check
      _
    $region27: #{tpu_custom_call.1} parent=1 // pred_check_branch
      %967 = sbr.rel (0) target = $region29
    $region28: #{tpu_custom_call.1} parent=1 // pred_region
      %968 = dma.done [#allocation4], 256
    $region29: #{tpu_custom_call.1} parent=1 // pred_fallthru
      _
    %969 = vsyncpa [#allocation3], 1
    %970 = vsyncpa [#allocation6], 1
    %971 = vsyncpa [#allocation4], 1

</llo_original>
